<compile_context>
chip_gen: v7x
topology: tpu7x:2x2x1
jax: 0.10.0
libtpu: 0.0.40
codegen_flags: <defaults>
</compile_context>

<pallas_src>
import math

import jax
import jax.numpy as jnp
from jax.experimental import pallas as pl
from jax.experimental.pallas import tpu as pltpu


def _matmul_bias_relu_kernel(p_ref, w_ref, b_ref, o_ref):
    """One batch element: out = relu(W_flat @ patches + bias), transposed layout.

    p_ref: (1, K, HW)     im2col patches, K = KH*KW*Cin, HW = H_out*W_out
    w_ref: (Cout, K)      flattened conv weights
    b_ref: (Cout, 1)      bias
    o_ref: (1, Cout, HW)  output (NCHW-native layout; HW on the lane axis)
    """
    acc = jnp.dot(w_ref[...], p_ref[0], preferred_element_type=jnp.float32)
    acc = acc + b_ref[...]                       # (Cout,1) broadcasts over HW lanes
    o_ref[0] = jnp.maximum(acc, 0.0).astype(o_ref.dtype)


def basic_conv2d(x_nchw, weight, bias, *, stride=1, padding=1):
    """Forward pass of BasicConv2d (Conv2d + ReLU).

    x_nchw : (N, Cin, H, W)          float32
    weight : (Cout, Cin, KH, KW)     float32  (PyTorch conv weight layout)
    bias   : (Cout,)                 float32
    returns: (N, Cout, H_out, W_out) float32
    """
    N, Cin, H, W = x_nchw.shape
    Cout, Cin_w, KH, KW = weight.shape
    assert Cin == Cin_w

    H_out = (H + 2 * padding - KH) // stride + 1
    W_out = (W + 2 * padding - KW) // stride + 1
    HW = H_out * W_out
    K = KH * KW * Cin

    # ---- wrapper-side layout plumbing: im2col with (kh, kw, cin) ordering ----
    x_nhwc = jnp.transpose(x_nchw, (0, 2, 3, 1))                     # (N, H, W, Cin)
    x_pad = jnp.pad(
        x_nhwc, ((0, 0), (padding, padding), (padding, padding), (0, 0))
    )
    # TODO(synk): at real Inception sizes, fuse padding + patch gather into the
    # kernel DMA (halo-tiled H) instead of materializing the padded copy in HBM.

    taps = []
    for kh in range(KH):
        for kw in range(KW):
            taps.append(
                x_pad[:,
                      kh:kh + (H_out - 1) * stride + 1:stride,
                      kw:kw + (W_out - 1) * stride + 1:stride,
                      :]                                             # (N, Ho, Wo, Cin)
            )
    patches = jnp.stack(taps, axis=3)                                # (N, Ho, Wo, KH*KW, Cin)
    patches = patches.reshape(N, HW, K)
    patches_t = jnp.transpose(patches, (0, 2, 1))                    # (N, K, HW)  lane-dense

    # Weight flattened to (Cout, KH*KW*Cin) with matching (kh, kw, cin) order.
    w_flat = jnp.transpose(weight, (0, 2, 3, 1)).reshape(Cout, K)
    b2d = bias.reshape(Cout, 1)

    out = pl.pallas_call(
        _matmul_bias_relu_kernel,
        out_shape=jax.ShapeDtypeStruct((N, Cout, HW), x_nchw.dtype),
        grid_spec=pltpu.PrefetchScalarGridSpec(
            num_scalar_prefetch=0,
            grid=(N,),
            in_specs=[
                pl.BlockSpec((1, K, HW), lambda n: (n, 0, 0)),
                pl.BlockSpec((Cout, K), lambda n: (0, 0)),
                pl.BlockSpec((Cout, 1), lambda n: (0, 0)),
            ],
            out_specs=pl.BlockSpec((1, Cout, HW), lambda n: (n, 0, 0)),
        ),
        compiler_params=pltpu.CompilerParams(
            dimension_semantics=("parallel",),
        ),
    )(patches_t, w_flat, b2d)

    # (N, Cout, HW) is already NCHW memory order -> zero-copy reshape.
    return out.reshape(N, Cout, H_out, W_out)


def _init_params(key, in_channels, out_channels, kh, kw):
    """Deterministic init mirroring nn.Conv2d defaults (kaiming-uniform-ish)."""
    kw_key, b_key = jax.random.split(key)
    fan_in = in_channels * kh * kw
    bound = 1.0 / math.sqrt(fan_in)
    weight = jax.random.uniform(
        kw_key, (out_channels, in_channels, kh, kw),
        minval=-bound, maxval=bound, dtype=jnp.float32,
    )
    bias = jax.random.uniform(
        b_key, (out_channels,), minval=-bound, maxval=bound, dtype=jnp.float32
    )
    return weight, bias


if __name__ == "__main__":
    key = jax.random.PRNGKey(0)
    x_key, p_key = jax.random.split(key)

    # Small shapes: batch=2, in_channels=4, out_channels=8, spatial=16.
    N, Cin, H, W = 2, 4, 16, 16
    Cout, KH, KW = 8, 3, 3

    x = jax.random.normal(x_key, (N, Cin, H, W), dtype=jnp.float32)
    weight, bias = _init_params(p_key, Cin, Cout, KH, KW)

    out = basic_conv2d(x, weight, bias, stride=1, padding=1)
    out = jax.block_until_ready(out)

    # Sanity check against a pure-JAX reference (conv + relu).
    ref = jax.lax.conv_general_dilated(
        x, weight, window_strides=(1, 1), padding=((1, 1), (1, 1)),
        dimension_numbers=("NCHW", "OIHW", "NCHW"),
    ) + bias.reshape(1, Cout, 1, 1)
    ref = jnp.maximum(ref, 0.0)
    assert out.shape == (N, Cout, H, W)
    assert jnp.allclose(out, ref, atol=1e-4, rtol=1e-4)

    print("KERNEL_OK")
</pallas_src>

<mosaic_0001>
module attributes {stable_mosaic.version = 11 : i64} {
  func.func @_matmul_bias_relu_kernel(%arg0: i32, %arg1: memref<1x36x256xf32, #tpu.memory_space<vmem>>, %arg2: memref<8x36xf32, #tpu.memory_space<vmem>>, %arg3: memref<8x1xf32, #tpu.memory_space<vmem>>, %arg4: memref<1x8x256xf32, #tpu.memory_space<vmem>>) attributes {dimension_semantics = [#tpu.dimension_semantics<parallel>], iteration_bounds = array<i64: 2>, scalar_prefetch = 0 : i64, scratch_operands = 0 : i64, tpu.core_type = #tpu.core_type<tc>, window_params = [{transform_indices = @transform_0, window_bounds = array<i64: 1, 36, 256>}, {pipeline_mode = #tpu.pipeline_mode<synchronous>, transform_indices = @transform_1, window_bounds = array<i64: 8, 36>}, {pipeline_mode = #tpu.pipeline_mode<synchronous>, transform_indices = @transform_2, window_bounds = array<i64: 8, 1>}, {transform_indices = @transform_3, window_bounds = array<i64: 1, 8, 256>}]} {
    %c0 = arith.constant 0 : index
    %c0_0 = arith.constant 0 : index
    %0 = vector.load %arg2[%c0, %c0_0] : memref<8x36xf32, #tpu.memory_space<vmem>>, vector<8x36xf32>
    %c0_1 = arith.constant 0 : index
    %c0_2 = arith.constant 0 : index
    %c0_3 = arith.constant 0 : index
    %1 = vector.load %arg1[%c0_1, %c0_2, %c0_3] : memref<1x36x256xf32, #tpu.memory_space<vmem>>, vector<1x36x256xf32>
    %2 = vector.shape_cast %1 : vector<1x36x256xf32> to vector<36x256xf32>
    %cst = arith.constant dense<0.000000e+00> : vector<8x256xf32>
    %3 = tpu.matmul %0, %2, %cst {dimension_numbers = #tpu.dot_dimension_numbers<[1], [0], [0], [1], [0, 0, 1, 1], [], []>} : vector<8x36xf32>, vector<36x256xf32>, vector<8x256xf32> -> vector<8x256xf32>
    %c0_4 = arith.constant 0 : index
    %c0_5 = arith.constant 0 : index
    %4 = vector.load %arg3[%c0_4, %c0_5] : memref<8x1xf32, #tpu.memory_space<vmem>>, vector<8x1xf32>
    %5 = vector.broadcast %4 : vector<8x1xf32> to vector<8x256xf32>
    %6 = arith.addf %3, %5 : vector<8x256xf32>
    %cst_6 = arith.constant 0.000000e+00 : f32
    %7 = vector.broadcast %cst_6 : f32 to vector<8x256xf32>
    %8 = arith.maximumf %6, %7 : vector<8x256xf32>
    %c0_7 = arith.constant 0 : index
    %c0_8 = arith.constant 0 : index
    %c0_9 = arith.constant 0 : index
    %9 = vector.load %arg4[%c0_7, %c0_8, %c0_9] : memref<1x8x256xf32, #tpu.memory_space<vmem>>, vector<1x8x256xf32>
    %10 = vector.shape_cast %9 : vector<1x8x256xf32> to vector<8x256xf32>
    %11 = vector.shape_cast %8 : vector<8x256xf32> to vector<1x8x256xf32>
    tpu.vector_store %arg4[%c0_7, %c0_8, %c0_9], %11 {strides = array<i32>} : memref<1x8x256xf32, #tpu.memory_space<vmem>>, vector<1x8x256xf32>,
    return
  }
  func.func @transform_0(%arg0: i32) -> (i32, i32, i32) {
    %c0_i32 = arith.constant 0 : i32
    %c0_i32_0 = arith.constant 0 : i32
    %c0_i32_1 = arith.constant 0 : i32
    return %arg0, %c0_i32, %c0_i32_0 : i32, i32, i32
  }
  func.func @transform_1(%arg0: i32) -> (i32, i32) {
    %c0_i32 = arith.constant 0 : i32
    %c0_i32_0 = arith.constant 0 : i32
    %c0_i32_1 = arith.constant 0 : i32
    return %c0_i32, %c0_i32_0 : i32, i32
  }
  func.func @transform_2(%arg0: i32) -> (i32, i32) {
    %c0_i32 = arith.constant 0 : i32
    %c0_i32_0 = arith.constant 0 : i32
    %c0_i32_1 = arith.constant 0 : i32
    return %c0_i32, %c0_i32_0 : i32, i32
  }
  func.func @transform_3(%arg0: i32) -> (i32, i32, i32) {
    %c0_i32 = arith.constant 0 : i32
    %c0_i32_0 = arith.constant 0 : i32
    %c0_i32_1 = arith.constant 0 : i32
    return %arg0, %c0_i32, %c0_i32_0 : i32, i32, i32
  }
}

</mosaic_0001>

<llo_original>
// kernel: tpu_custom_call.1
$region0: #{tpu_custom_call.1}
  #allocation0 [shape = 'u32[]', space=smem, size = 0x4, offset = 0x4, fixed_abs, tag = 'smem constant byte address 0x4 - core index']
  #allocation1 [shape = 'u32[144,128]{1,0:T(1,128)}', space=vmem, size = 0x12000, scoped, tag = 'internal scratch']
  %s0 = inlined_call_operand.vmem [shape: f32[2,36,256], index: 0, kind: input, shape index: {}]
  %s1 = inlined_call_operand.vmem [shape: f32[8,36], index: 1, kind: input, shape index: {}]
  %s2 = inlined_call_operand.vmem [shape: f32[8,1], index: 2, kind: input, shape index: {}]
  %s3 = inlined_call_operand.hbm [shape: f32[2,8,256], index: 3, kind: output, shape index: {}]
  %s4 = sld [smem:[#allocation0]]
  $region45: #{tpu_custom_call.1} parent=0
    _
  %s6 = ssub.s32 1, %s4
  %s7 = scalar_select 0, %s6, %s4
  $region1: #{tpu_custom_call.1} parent=0
    #allocation2 [shape = 'u8[16384]{0}', space=vmem, size = 0x4000, scoped, tag = 'output window, operand 0']
    #allocation3 [shape = 's32[2]{0}', space=sflag, size = 0x8, scoped, tag = 'scoped memory for tpu_custom_call.1']
    %8 = vsyncpa [#allocation3], 0
    %s9 = scalar_lea.sflag [#allocation3], 1
    %10 = vsyncpa %s9, 0
    loop: start=0, step=1, limit=4
    $region2: #{tpu_custom_call.1} parent=1 // loop_pre_header
      _
    $region3: #{tpu_custom_call.1} parent=1 // loop_header
      %s12 = sphi 0, %s16
      %p13 = scmp.ge.s32.totalorder %s12, 4
      %s22 = sphi 0, %s24
      %s25 = sphi 0, %s22
      %s26 = sphi 0, %s25
      %s42 = sphi 0, %s26
      %s46 = sphi 0, %s46
      %s48 = sphi 0, %s46
      %s49 = sphi 0, %s48
      %s63 = sphi 0, %s49
      %s67 = sphi 0, %s67
      %s69 = sphi 0, %s67
      %s70 = sphi 0, %s69
      %s84 = sphi 0, %s70
      %s90 = sphi 0, %s92
      %s93 = sphi 0, %s90
      %s94 = sphi 0, %s93
      %s110 = sphi 0, %s94
    $region4: #{tpu_custom_call.1} parent=1 // loop_header_branch
      %15 = sbr.rel (%p13) target = $region8
    $region5: #{tpu_custom_call.1} parent=1 // loop_body
      %s17 = ssub.s32 %s12, 1
      %s18 = ssub.s32 %s12, 2
      %s19 = sadd.s32 %s12, 1
      %s20 = ssub.s32 %s12, %s19
      %p21 = scmp.eq.s32.totalorder %s20, 0
      %s23 = sadd.s32 %s22, 1
      %s24 = scalar_select %p21, %s22, %s23
      %p27 = pneg %p21
      %p28 = scmp.eq.s32.totalorder %s12, 1
      %p29 = por %p27, %p28
      %p30 = scmp.ne.s32.totalorder %s22, %s25
      %p31 = scmp.eq.s32.totalorder %s12, 0
      %p32 = por %p30, %p31
      %p33 = scmp.ne.s32.totalorder %s22, %s25
      %p34 = scmp.eq.s32.totalorder %s17, 1
      %p35 = por %p33, %p34
      %p36 = scmp.ne.s32.totalorder %s25, %s26
      %p37 = scmp.eq.s32.totalorder %s17, 0
      %p38 = por %p36, %p37
      %p39 = scmp.ne.s32.totalorder %s25, %s26
      %p40 = scmp.eq.s32.totalorder %s18, 1
      %p41 = por %p39, %p40
      %p43 = scmp.ne.s32.totalorder %s26, %s42
      %p44 = scmp.eq.s32.totalorder %s18, 0
      %p45 = por %p43, %p44
      %s47 = sadd.s32 %s46, 1
      %p50 = scmp.eq.s32.totalorder %s12, 1
      %p51 = scmp.ne.s32.totalorder %s46, %s48
      %p52 = scmp.eq.s32.totalorder %s12, 0
      %p53 = por %p51, %p52
      %p54 = scmp.ne.s32.totalorder %s46, %s48
      %p55 = scmp.eq.s32.totalorder %s17, 1
      %p56 = por %p54, %p55
      %p57 = scmp.ne.s32.totalorder %s48, %s49
      %p58 = scmp.eq.s32.totalorder %s17, 0
      %p59 = por %p57, %p58
      %p60 = scmp.ne.s32.totalorder %s48, %s49
      %p61 = scmp.eq.s32.totalorder %s18, 1
      %p62 = por %p60, %p61
      %p64 = scmp.ne.s32.totalorder %s49, %s63
      %p65 = scmp.eq.s32.totalorder %s18, 0
      %p66 = por %p64, %p65
      %s68 = sadd.s32 %s67, 1
      %p71 = scmp.eq.s32.totalorder %s12, 1
      %p72 = scmp.ne.s32.totalorder %s67, %s69
      %p73 = scmp.eq.s32.totalorder %s12, 0
      %p74 = por %p72, %p73
      %p75 = scmp.ne.s32.totalorder %s67, %s69
      %p76 = scmp.eq.s32.totalorder %s17, 1
      %p77 = por %p75, %p76
      %p78 = scmp.ne.s32.totalorder %s69, %s70
      %p79 = scmp.eq.s32.totalorder %s17, 0
      %p80 = por %p78, %p79
      %p81 = scmp.ne.s32.totalorder %s69, %s70
      %p82 = scmp.eq.s32.totalorder %s18, 1
      %p83 = por %p81, %p82
      %p85 = scmp.ne.s32.totalorder %s70, %s84
      %p86 = scmp.eq.s32.totalorder %s18, 0
      %p87 = por %p85, %p86
      %s88 = ssub.s32 %s12, %s19
      %p89 = scmp.eq.s32.totalorder %s88, 0
      %s91 = sadd.s32 %s90, 1
      %s92 = scalar_select %p89, %s90, %s91
      %p95 = pneg %p89
      %p96 = scmp.eq.s32.totalorder %s12, 1
      %p97 = por %p95, %p96
      %p98 = scmp.ne.s32.totalorder %s90, %s93
      %p99 = scmp.eq.s32.totalorder %s12, 0
      %p100 = por %p98, %p99
      %p101 = scmp.ne.s32.totalorder %s90, %s93
      %p102 = scmp.eq.s32.totalorder %s17, 1
      %p103 = por %p101, %p102
      %p104 = scmp.ne.s32.totalorder %s93, %s94
      %p105 = scmp.eq.s32.totalorder %s17, 0
      %p106 = por %p104, %p105
      %p107 = scmp.ne.s32.totalorder %s93, %s94
      %p108 = scmp.eq.s32.totalorder %s18, 1
      %p109 = por %p107, %p108
      %p111 = scmp.ne.s32.totalorder %s94, %s110
      %p112 = scmp.eq.s32.totalorder %s18, 0
      %p113 = por %p111, %p112
      %p114 = scmp.le.s32.totalorder 1, %s12
      %p115 = scmp.lt.s32.totalorder %s12, 3
      %p116 = pnand %p114, %p115
      %p117 = pneg %p116
      // Predicated region
      $region9: #{tpu_custom_call.1} parent=5 // pred_check
        _
      $region10: #{tpu_custom_call.1} parent=5 // pred_check_branch
        %119 = sbr.rel (%p116) target = $region12
      $region11: #{tpu_custom_call.1} parent=5 // pred_region
        %s120 = ssub.s32 %s12, 1
        // Predicated region
        $region13: #{tpu_custom_call.1} parent=11 // pred_check
          %p121 = pneg %p59
        $region14: #{tpu_custom_call.1} parent=11 // pred_check_branch
          %123 = sbr.rel (%p121) target = $region16
        $region15: #{tpu_custom_call.1} parent=11 // pred_region
          _
        $region16: #{tpu_custom_call.1} parent=11 // pred_fallthru
          _
        // Predicated region
        $region17: #{tpu_custom_call.1} parent=11 // pred_check
          %p124 = pneg %p80
        $region18: #{tpu_custom_call.1} parent=11 // pred_check_branch
          %126 = sbr.rel (%p124) target = $region20
        $region19: #{tpu_custom_call.1} parent=11 // pred_region
          _
        $region20: #{tpu_custom_call.1} parent=11 // pred_fallthru
          _
      $region12: #{tpu_custom_call.1} parent=5 // pred_fallthru
        _
      %p127 = scmp.lt.s32.totalorder %s12, 2
      // Predicated region
      $region21: #{tpu_custom_call.1} parent=5 // pred_check
        %p128 = pneg %p127
      $region22: #{tpu_custom_call.1} parent=5 // pred_check_branch
        %130 = sbr.rel (%p128) target = $region24
      $region23: #{tpu_custom_call.1} parent=5 // pred_region
        // Predicated region
        $region25: #{tpu_custom_call.1} parent=23 // pred_check
          %p131 = pneg %p32
        $region26: #{tpu_custom_call.1} parent=23 // pred_check_branch
          %133 = sbr.rel (%p131) target = $region28
        $region27: #{tpu_custom_call.1} parent=23 // pred_region
          %p134 = scmp.lt.s32.totalorder %s12, 1
          %s135 = scalar_select %p134, %s12, 1
          %s136 = smul.addr %s135, 10
          %s137 = smul.addr %s136, 8
          %s138 = scalar_lea.vmem %s0, %s137
        $region28: #{tpu_custom_call.1} parent=23 // pred_fallthru
          _
      $region24: #{tpu_custom_call.1} parent=5 // pred_fallthru
        _
      %p139 = scmp.le.s32.totalorder 1, %s12
      %p140 = scmp.lt.s32.totalorder %s12, 3
      %p141 = pnand %p139, %p140
      %p142 = pneg %p141
      // Predicated region
      $region29: #{tpu_custom_call.1} parent=5 // pred_check
        _
      $region30: #{tpu_custom_call.1} parent=5 // pred_check_branch
        %144 = sbr.rel (%p141) target = $region32
      $region31: #{tpu_custom_call.1} parent=5 // pred_region
        %s145 = ssub.s32 %s12, 1
        %p146 = scmp.lt.s32.totalorder %s17, 1
        %s147 = scalar_select %p146, %s17, 1
        %s148 = smul.addr %s147, 10
        %s149 = smul.addr %s148, 8
        %s150 = scalar_lea.vmem %s0, %s149
        %p151 = pneg %p38
        %p152 = pneg %p35
        %p153 = pneg %p59
        %p154 = pneg %p56
        %p155 = pneg %p80
        %p156 = pneg %p77
        %p157 = pneg %p106
        %p158 = pneg %p103
        %s159 = sand.u32 %s93, 1
        %s160 = scalar_lea.sflag [#allocation3], %s159
        %s161 = sand.u32 %s93, 1
        %s162 = smul.addr %s161, 16
        %s163 = scalar_lea.vmem [#allocation2], %s162
        %p164 = scmp.lt.s32.totalorder %s17, 1
        %s165 = scalar_select %p164, %s17, 1
        %s166 = smul.addr %s165, 10
        %s167 = smul.addr %s166, 8
        %s168 = scalar_lea.vmem %s0, %s167
        %v169 = vld [vmem:[%s1] sm:$0xff]
        %v170 = vld [vmem:[%s168] sm:$0xff]
        %v171 = vld [vmem:[%s168 + $0x8] sm:$0xff]
        %v172 = vld [vmem:[%s168 + $0x10] sm:$0xff]
        %v173 = vld [vmem:[%s168 + $0x18] sm:$0xff]
        %v174 = vld [vmem:[%s168 + $0x20] sm:$0xff]
        %v175 = vld [vmem:[%s168 + $0x28] sm:$0xff]
        %v176 = vld [vmem:[%s168 + $0x30] sm:$0xff]
        %v177 = vld [vmem:[%s168 + $0x38] sm:$0xff]
        %v178 = vld [vmem:[%s168 + $0x40] sm:$0xf]
        %v179 = vld [vmem:[%s168 + $0x48] sm:$0xf]
        %v180 = vld [vmem:[%s2] sm:$0xff]
        %182 = vset.pattern.permute.xlu0 0
        %183 = vperm.xlu0 %182, %v180
        %v184 = vpop.permute.xlu0 %183
        %vm186 = vcmask 293888
        %v188 = vsel %vm186, %v169, 0
        %vm190 = vcmask 1043456
        %v192 = vsel %vm190, %v178, 0
        %v195 = vsel %vm190, %v179, 0
        %197 = vmatprep.subr.mxu0 %v171
        %198 = vmatpush1.msra.mxu0 %v170
        %199 = vmatprep.subr.mxu0 %v173
        %200 = vmatpush1.msra.mxu0 %v172
        %201 = vmatprep.subr.mxu0 %v175
        %202 = vmatpush1.msra.mxu0 %v174
        %203 = vmatprep.subr.mxu0 %v177
        %204 = vmatpush1.msra.mxu0 %v176
        %205 = vmatprep.subr.mxu0 %v195
        %206 = vmatpush1.msra.mxu0 %v192
        %207 = vmatprep.subr.mxu0 0.0
        %208 = vmatpush1.msra.mxu0 0.0
        %209 = vmatprep.subr.mxu0 0.0
        %210 = vmatpush1.msra.mxu0 0.0
        %211 = vmatprep.subr.mxu0 0.0
        %212 = vmatpush1.msra.mxu0 0.0
        %213 = vmatprep.subr.mxu0 0.0
        %214 = vmatpush1.msra.mxu0 0.0
        %215 = vmatprep.subr.mxu0 0.0
        %216 = vmatpush1.msra.mxu0 0.0
        %217 = vmatprep.subr.mxu0 0.0
        %218 = vmatpush1.msra.mxu0 0.0
        %219 = vmatprep.subr.mxu0 0.0
        %220 = vmatpush1.msra.mxu0 0.0
        %221 = vmatprep.subr.mxu0 0.0
        %222 = vmatpush1.msra.mxu0 0.0
        %223 = vmatprep.subr.mxu0 0.0
        %224 = vmatpush1.msra.mxu0 0.0
        %225 = vmatprep.subr.mxu0 0.0
        %226 = vmatpush1.msra.mxu0 0.0
        %227 = vmatprep.subr.mxu0 0.0
        %228 = vmatpush1.msra.mxu0 0.0
        %229 = vmatprep.subr.mxu0 0.0
        %230 = vmatpush1.msra.mxu0 0.0
        %231 = vmatprep.subr.mxu0 0.0
        %232 = vmatpush1.msra.mxu0 0.0
        %233 = vmatprep.subr.mxu0 0.0
        %234 = vmatpush1.msra.mxu0 0.0
        %235 = vmatprep.subr.mxu0 0.0
        %236 = vmatpush1.msra.mxu0 0.0
        %237 = vmatprep.subr.mxu0 0.0
        %238 = vmatpush1.msra.mxu0 0.0
        %239 = vmatprep.subr.mxu0 0.0
        %240 = vmatpush1.msra.mxu0 0.0
        %241 = vmatprep.subr.mxu0 0.0
        %242 = vmatpush1.msra.mxu0 0.0
        %243 = vmatprep.subr.mxu0 0.0
        %244 = vmatpush1.msra.mxu0 0.0
        %245 = vmatprep.subr.mxu0 0.0
        %246 = vmatpush1.msra.mxu0 0.0
        %247 = vmatprep.subr.mxu0 0.0
        %248 = vmatpush1.msra.mxu0 0.0
        %249 = vmatprep.subr.mxu0 0.0
        %250 = vmatpush1.msra.mxu0 0.0
        %251 = vmatprep.subr.mxu0 0.0
        %252 = vmatpush1.msra.mxu0 0.0
        %253 = vmatprep.subr.mxu0 0.0
        %254 = vmatpush1.msra.mxu0 0.0
        %255 = vmatprep.subr.mxu0 0.0
        %256 = vmatpush1.msra.mxu0 0.0
        %257 = vmatprep.subr.mxu0 0.0
        %258 = vmatpush1.msra.mxu0 0.0
        %259 = vmatprep.subr.mxu0 0.0
        %260 = vmatpush1.msra.mxu0 0.0
        %261 = vmatprep.mubr.f32.mxu0 0.0
        %262 = vmatmul.mubr.f32.gmra.mrb[0].mxu0 %v188
        %v263 = vpop.f32.mrb[0].mxu0
        %v264 = vadd.f32 %v184, %v263
        %v265 = vpop.f32.mrb[0].mxu0
        %v266 = vadd.f32 %v184, %v265
        %267 = vdwg.mxu0
        %v268 = vmax.f32 %v264, 0.0
        %v269 = vmax.f32 %v266, 0.0
        %270 = vst [vmem:[%s163] sm:$0xff] %v268
        %271 = vst [vmem:[%s163 + $0x8] sm:$0xff] %v269
        %s272 = sand.u32 %s93, 1
        %s273 = scalar_lea.sflag [#allocation3], %s272
        %s274 = sand.u32 %s93, 1
        %s275 = smul.addr %s274, 16
        %s276 = scalar_lea.vmem [#allocation2], %s275
        // Predicated region
        $region33: #{tpu_custom_call.1} parent=31 // pred_check
          %p277 = pneg %p103
        $region34: #{tpu_custom_call.1} parent=31 // pred_check_branch
          %279 = sbr.rel (%p277) target = $region36
        $region35: #{tpu_custom_call.1} parent=31 // pred_region
          %s281 = ssub.s32 256, 256
          %282 = vsyncadd %s273, %s281
          %s283 = smul.addr %s17, 2
          %s284 = smul.addr %s283, 128
          %s285 = scalar_lea.hbm %s3, %s284
          %s287 = sshll.u32 %s276, 4
          %s288 = int_to_ptr.vmem [resolvable:$true] %s287
          %290 = dma.vmem_to_hbm [thread:$0]  %s288, 256, %s285, %s273
        $region36: #{tpu_custom_call.1} parent=31 // pred_fallthru
          _
      $region32: #{tpu_custom_call.1} parent=5 // pred_fallthru
        _
      %p291 = scmp.le.s32.totalorder 2, %s12
      // Predicated region
      $region37: #{tpu_custom_call.1} parent=5 // pred_check
        %p292 = pneg %p291
      $region38: #{tpu_custom_call.1} parent=5 // pred_check_branch
        %294 = sbr.rel (%p292) target = $region40
      $region39: #{tpu_custom_call.1} parent=5 // pred_region
        %s295 = ssub.s32 %s12, 2
        // Predicated region
        $region41: #{tpu_custom_call.1} parent=39 // pred_check
          %p296 = pneg %p109
        $region42: #{tpu_custom_call.1} parent=39 // pred_check_branch
          %298 = sbr.rel (%p296) target = $region44
        $region43: #{tpu_custom_call.1} parent=39 // pred_region
          %s299 = sand.u32 %s94, 1
          %s300 = scalar_lea.sflag [#allocation3], %s299
          %s301 = sand.u32 %s94, 1
          %s302 = smul.addr %s301, 16
          %s303 = scalar_lea.vmem [#allocation2], %s302
          %304 = dma.done %s300, 256
        $region44: #{tpu_custom_call.1} parent=39 // pred_fallthru
          _
      $region40: #{tpu_custom_call.1} parent=5 // pred_fallthru
        _
    $region6: #{tpu_custom_call.1} parent=1 // loop_footer
      %s16 = sadd.s32 1, %s12
    $region7: #{tpu_custom_call.1} parent=1 // loop_footer_branch
      %11 = sbr.rel target = $region3
    $region8: #{tpu_custom_call.1} parent=1 // loop_exit
      _
    %305 = vsyncpa [#allocation3], 1
    %s306 = scalar_lea.sflag [#allocation3], 1
    %307 = vsyncpa %s306, 1

</llo_original>
